<compile_context>
chip_gen: v7x
topology: tpu7x:2x2x1
jax: 0.10.0
libtpu: 0.0.40
codegen_flags: <defaults>
</compile_context>

<pallas_src>
import jax
import jax.numpy as jnp
import numpy as np
from jax.experimental import pallas as pl
from jax.experimental.pallas import tpu as pltpu

_SCALE = 10.0 / np.log(10.0)                                      # 10 / ln(10)
_Y_COEF = np.array([65.481, 128.553, 24.966], dtype=np.float32)   # (1,3,1,1) in torch
_LANES = 128
_BLOCK_BYTES = 2 * 1024 * 1024   # per-input-block VMEM budget (x4 live blocks ~ 8 MiB)


def _sse_kernel(pred_ref, targ_ref, out_ref):
    """Per-sample sum of squared differences (lane-partial).

    pred_ref/targ_ref: (1, TR, 128) tiles of one sample, original dtype.
    out_ref:           (1, 1, 128) f32 lane-partials, revisited across grid axis 1.
    """
    k = pl.program_id(1)

    @pl.when(k == 0)
    def _init():
        out_ref[...] = jnp.zeros_like(out_ref)

    diff = pred_ref[...].astype(jnp.float32) - targ_ref[...].astype(jnp.float32)
    # Sublane reduce per step; the cross-lane reduce is deferred to the wrapper.
    out_ref[...] += jnp.sum(diff * diff, axis=1, keepdims=True)


def _sse_toy_kernel(pred_ref, targ_ref, out_ref):
    """Fused Y-channel mix + sum of squared differences (lane-partial).

    pred_ref/targ_ref: (1, 3, TR, 128) tiles of one sample, original dtype.
    out_ref:           (1, 1, 128) f32 lane-partials, revisited across grid axis 1.
    """
    k = pl.program_id(1)

    @pl.when(k == 0)
    def _init():
        out_ref[...] = jnp.zeros_like(out_ref)

    c0 = np.float32(_Y_COEF[0])
    c1 = np.float32(_Y_COEF[1])
    c2 = np.float32(_Y_COEF[2])
    inv255 = np.float32(1.0 / 255.0)

    # Per-channel loads keep value liveness low; mix in f32 (matches torch's
    # promotion of x * float32 coef). The +16 bias cancels in the difference.
    py = (pred_ref[:, 0].astype(jnp.float32) * c0
          + pred_ref[:, 1].astype(jnp.float32) * c1
          + pred_ref[:, 2].astype(jnp.float32) * c2)              # (1, TR, 128)
    ty = (targ_ref[:, 0].astype(jnp.float32) * c0
          + targ_ref[:, 1].astype(jnp.float32) * c1
          + targ_ref[:, 2].astype(jnp.float32) * c2)
    diff = (py - ty) * inv255
    out_ref[...] += jnp.sum(diff * diff, axis=1, keepdims=True)


def _choose_rows_per_block(r, itemsize, channels=1):
    """Pick rows-per-block (multiple of 8) from the ~2 MiB per-block VMEM budget."""
    budget_rows = max(8, (_BLOCK_BYTES // (channels * _LANES * itemsize)) // 8 * 8)
    if r <= budget_rows:
        return (r + 7) // 8 * 8, 1
    if r % 8 == 0:
        # Prefer a divisor of r (multiple of 8, not too small) -> no padding needed.
        t = budget_rows
        while t >= 512:
            if r % t == 0:
                return t, r // t
            t -= 8
    n_blocks = -(-r // budget_rows)
    return budget_rows, n_blocks


def psnr_loss(pred, target, *, loss_weight=1.0, reduction="mean", toY=False):
    assert reduction == "mean"
    assert pred.ndim == 4 and target.ndim == 4
    assert target.shape == pred.shape

    n, c, h, w = pred.shape
    if toY:
        assert c == 3, "toY expects 3-channel input"
        d = h * w            # effective pixel count of the mixed Y image
        channels = 3
    else:
        d = c * h * w
        channels = 1

    itemsize = jnp.dtype(pred.dtype).itemsize
    r = -(-d // _LANES)                      # rows of 128 lanes
    tr, n_blocks = _choose_rows_per_block(r, itemsize, channels)
    r_pad = tr * n_blocks
    d_pad = r_pad * _LANES

    if toY:
        # Keep the raw 3-channel images in HBM; the kernel fuses the Y mix.
        pred2 = pred.reshape(n, 3, d)
        targ2 = target.reshape(n, 3, d)
        if d_pad != d:
            # TODO(synk): a masked ragged last tile would avoid this padding copy.
            pred2 = jnp.pad(pred2, ((0, 0), (0, 0), (0, d_pad - d)))
            targ2 = jnp.pad(targ2, ((0, 0), (0, 0), (0, d_pad - d)))
        pred_in = pred2.reshape(n, 3, r_pad, _LANES)
        targ_in = targ2.reshape(n, 3, r_pad, _LANES)
        kernel = _sse_toy_kernel
        in_specs = [
            pl.BlockSpec((1, 3, tr, _LANES), lambda i, k: (i, 0, k, 0)),
            pl.BlockSpec((1, 3, tr, _LANES), lambda i, k: (i, 0, k, 0)),
        ]
    else:
        pred2 = pred.reshape(n, d)
        targ2 = target.reshape(n, d)
        if d_pad != d:
            pred2 = jnp.pad(pred2, ((0, 0), (0, d_pad - d)))
            targ2 = jnp.pad(targ2, ((0, 0), (0, d_pad - d)))
        pred_in = pred2.reshape(n, r_pad, _LANES)
        targ_in = targ2.reshape(n, r_pad, _LANES)
        kernel = _sse_kernel
        in_specs = [
            pl.BlockSpec((1, tr, _LANES), lambda i, k: (i, k, 0)),
            pl.BlockSpec((1, tr, _LANES), lambda i, k: (i, k, 0)),
        ]

    partials = pl.pallas_call(
        kernel,
        out_shape=jax.ShapeDtypeStruct((n, 1, _LANES), jnp.float32),
        grid_spec=pltpu.PrefetchScalarGridSpec(
            num_scalar_prefetch=0,
            grid=(n, n_blocks),
            in_specs=in_specs,
            out_specs=pl.BlockSpec((1, 1, _LANES), lambda i, k: (i, 0, 0)),
        ),
        compiler_params=pltpu.CompilerParams(
            dimension_semantics=("parallel", "arbitrary"),
            vmem_limit_bytes=32 * 1024 * 1024,
        ),
    )(pred_in, targ_in)

    # Cheap epilogue on the tiny (N, 128) lane-partials.
    sse = jnp.sum(partials.reshape(n, _LANES), axis=-1)
    mse = sse * np.float32(1.0 / d) + np.float32(1e-8)
    return np.float32(loss_weight * _SCALE) * jnp.mean(jnp.log(mse))


def _reference(pred, target, *, loss_weight=1.0, toY=False):
    if toY:
        coef = jnp.asarray(_Y_COEF).reshape(1, 3, 1, 1)
        pred = (pred.astype(jnp.float32) * coef).sum(axis=1, keepdims=True) + 16.0
        target = (target.astype(jnp.float32) * coef).sum(axis=1, keepdims=True) + 16.0
        pred, target = pred / 255.0, target / 255.0
    diff = pred.astype(jnp.float32) - target.astype(jnp.float32)
    mse = jnp.mean(diff * diff, axis=(1, 2, 3))
    return loss_weight * _SCALE * jnp.mean(jnp.log(mse + 1e-8))


if __name__ == "__main__":
    key = jax.random.PRNGKey(0)
    k1, k2, k3, k4 = jax.random.split(key, 4)

    # Case 1: small NCHW, D divisible by 128 (no padding path).
    pred = jax.random.uniform(k1, (2, 4, 16, 16), dtype=jnp.float32)
    target = jax.random.uniform(k2, (2, 4, 16, 16), dtype=jnp.float32)
    loss = jax.block_until_ready(psnr_loss(pred, target, loss_weight=1.0))
    ref = _reference(pred, target, loss_weight=1.0)
    np.testing.assert_allclose(np.asarray(loss), np.asarray(ref), rtol=1e-5, atol=1e-5)

    # Case 2: odd spatial size (H*W % 128 != 0) -> zero-pad path, fused toY=True.
    p2 = jax.random.uniform(k3, (2, 3, 15, 15), dtype=jnp.float32)
    t2 = jax.random.uniform(k4, (2, 3, 15, 15), dtype=jnp.float32)
    loss2 = jax.block_until_ready(psnr_loss(p2, t2, toY=True))
    ref2 = _reference(p2, t2, toY=True)
    np.testing.assert_allclose(np.asarray(loss2), np.asarray(ref2), rtol=1e-4, atol=1e-5)

    # Case 3: fused toY with 128-divisible H*W (no padding) on bf16 inputs.
    p3 = jax.random.uniform(k1, (2, 3, 16, 16), dtype=jnp.bfloat16)
    t3 = jax.random.uniform(k2, (2, 3, 16, 16), dtype=jnp.bfloat16)
    loss3 = jax.block_until_ready(psnr_loss(p3, t3, toY=True))
    ref3 = _reference(p3, t3, toY=True)
    np.testing.assert_allclose(np.asarray(loss3), np.asarray(ref3), rtol=1e-3, atol=1e-4)

    # Case 4: bf16 inputs streamed without a wrapper upcast (non-toY).
    p4 = jax.random.uniform(k3, (2, 4, 16, 16), dtype=jnp.bfloat16)
    t4 = jax.random.uniform(k4, (2, 4, 16, 16), dtype=jnp.bfloat16)
    loss4 = jax.block_until_ready(psnr_loss(p4, t4))
    ref4 = _reference(p4, t4)
    np.testing.assert_allclose(np.asarray(loss4), np.asarray(ref4), rtol=1e-3, atol=1e-4)

    print("KERNEL_OK")
</pallas_src>

<mosaic_0001>
module attributes {stable_mosaic.version = 11 : i64} {
  func.func @_sse_kernel(%arg0: i32, %arg1: i32, %arg2: memref<1x8x128xf32, #tpu.memory_space<vmem>>, %arg3: memref<1x8x128xf32, #tpu.memory_space<vmem>>, %arg4: memref<1x1x128xf32, #tpu.memory_space<vmem>>) attributes {dimension_semantics = [#tpu.dimension_semantics<parallel>, #tpu.dimension_semantics<arbitrary>], iteration_bounds = array<i64: 2, 1>, scalar_prefetch = 0 : i64, scratch_operands = 0 : i64, tpu.core_type = #tpu.core_type<tc>, window_params = [{transform_indices = @transform_0, window_bounds = array<i64: 1, 8, 128>}, {transform_indices = @transform_1, window_bounds = array<i64: 1, 8, 128>}, {transform_indices = @transform_2, window_bounds = array<i64: 1, 1, 128>}]} {
    %c0_i32 = arith.constant 0 : i32
    %0 = arith.cmpi eq, %arg1, %c0_i32 : i32
    %1 = arith.extui %0 : i1 to i32
    %c0_i32_0 = arith.constant 0 : i32
    %2 = arith.cmpi ne, %1, %c0_i32_0 : i32
    scf.if %2 {
      %cst_12 = arith.constant 0.000000e+00 : f32
      %12 = vector.broadcast %cst_12 : f32 to vector<1x1x128xf32>
      %c0_13 = arith.constant 0 : index
      %c0_14 = arith.constant 0 : index
      %c0_15 = arith.constant 0 : index
      %13 = vector.load %arg4[%c0_13, %c0_14, %c0_15] : memref<1x1x128xf32, #tpu.memory_space<vmem>>, vector<1x1x128xf32>
      tpu.vector_store %arg4[%c0_13, %c0_14, %c0_15], %12 {strides = array<i32>} : memref<1x1x128xf32, #tpu.memory_space<vmem>>, vector<1x1x128xf32>,
    } else {
    }
    %c0 = arith.constant 0 : index
    %c0_1 = arith.constant 0 : index
    %c0_2 = arith.constant 0 : index
    %3 = vector.load %arg2[%c0, %c0_1, %c0_2] : memref<1x8x128xf32, #tpu.memory_space<vmem>>, vector<1x8x128xf32>
    %c0_3 = arith.constant 0 : index
    %c0_4 = arith.constant 0 : index
    %c0_5 = arith.constant 0 : index
    %4 = vector.load %arg3[%c0_3, %c0_4, %c0_5] : memref<1x8x128xf32, #tpu.memory_space<vmem>>, vector<1x8x128xf32>
    %5 = arith.subf %3, %4 : vector<1x8x128xf32>
    %c0_6 = arith.constant 0 : index
    %c0_7 = arith.constant 0 : index
    %c0_8 = arith.constant 0 : index
    %6 = vector.load %arg4[%c0_6, %c0_7, %c0_8] : memref<1x1x128xf32, #tpu.memory_space<vmem>>, vector<1x1x128xf32>
    %7 = arith.mulf %5, %5 : vector<1x8x128xf32>
    %cst = arith.constant dense<0.000000e+00> : vector<1x128xf32>
    %8 = vector.multi_reduction <add>, %7, %cst [1] : vector<1x8x128xf32> to vector<1x128xf32>
    %9 = vector.shape_cast %8 : vector<1x128xf32> to vector<1x1x128xf32>
    %10 = arith.addf %6, %9 : vector<1x1x128xf32>
    %c0_9 = arith.constant 0 : index
    %c0_10 = arith.constant 0 : index
    %c0_11 = arith.constant 0 : index
    %11 = vector.load %arg4[%c0_9, %c0_10, %c0_11] : memref<1x1x128xf32, #tpu.memory_space<vmem>>, vector<1x1x128xf32>
    tpu.vector_store %arg4[%c0_9, %c0_10, %c0_11], %10 {strides = array<i32>} : memref<1x1x128xf32, #tpu.memory_space<vmem>>, vector<1x1x128xf32>,
    return
  }
  func.func @transform_0(%arg0: i32, %arg1: i32) -> (i32, i32, i32) {
    %c0_i32 = arith.constant 0 : i32
    %c0_i32_0 = arith.constant 0 : i32
    return %arg0, %arg1, %c0_i32 : i32, i32, i32
  }
  func.func @transform_1(%arg0: i32, %arg1: i32) -> (i32, i32, i32) {
    %c0_i32 = arith.constant 0 : i32
    %c0_i32_0 = arith.constant 0 : i32
    return %arg0, %arg1, %c0_i32 : i32, i32, i32
  }
  func.func @transform_2(%arg0: i32, %arg1: i32) -> (i32, i32, i32) {
    %c0_i32 = arith.constant 0 : i32
    %c0_i32_0 = arith.constant 0 : i32
    %c0_i32_1 = arith.constant 0 : i32
    return %arg0, %c0_i32, %c0_i32_0 : i32, i32, i32
  }
}

</mosaic_0001>

<llo_original>
// kernel: tpu_custom_call.1
$region0: #{tpu_custom_call.1}
  #allocation0 [shape = 'u32[]', space=smem, size = 0x4, offset = 0x4, fixed_abs, tag = 'smem constant byte address 0x4 - core index']
  #allocation1 [shape = 'u32[144,128]{1,0:T(1,128)}', space=vmem, size = 0x12000, scoped, tag = 'internal scratch']
  %s0 = inlined_call_operand.hbm [shape: f32[2,8,128], index: 0, kind: input, shape index: {}]
  %s1 = inlined_call_operand.hbm [shape: f32[2,8,128], index: 1, kind: input, shape index: {}]
  %s2 = inlined_call_operand.hbm [shape: f32[2,1,128], index: 2, kind: output, shape index: {}]
  %s3 = sld [smem:[#allocation0]]
  $region53: #{tpu_custom_call.1} parent=0
    _
  %s5 = ssub.s32 1, %s3
  %s6 = scalar_select 0, %s5, %s3
  $region1: #{tpu_custom_call.1} parent=0
    #allocation2 [shape = 'u8[8192]{0}', space=vmem, size = 0x2000, scoped, tag = 'input window, operand 0']
    #allocation3 [shape = 's32[2]{0}', space=sflag, size = 0x8, scoped, tag = 'scoped memory for tpu_custom_call.1']
    #allocation4 [shape = 's32[2]{0}', space=sflag, size = 0x8, scoped, tag = 'scoped memory for tpu_custom_call.1']
    #allocation5 [shape = 'u8[8192]{0}', space=vmem, size = 0x2000, scoped, tag = 'input window, operand 1']
    #allocation6 [shape = 's32[2]{0}', space=sflag, size = 0x8, scoped, tag = 'scoped memory for tpu_custom_call.1']
    #allocation7 [shape = 'u8[1024]{0}', space=vmem, size = 0x400, scoped, tag = 'output window, operand 0']
    %7 = vsyncpa [#allocation3], 0
    %s8 = scalar_lea.sflag [#allocation3], 1
    %9 = vsyncpa %s8, 0
    %10 = vsyncpa [#allocation6], 0
    %s11 = scalar_lea.sflag [#allocation6], 1
    %12 = vsyncpa %s11, 0
    %13 = vsyncpa [#allocation4], 0
    %s14 = scalar_lea.sflag [#allocation4], 1
    %15 = vsyncpa %s14, 0
    loop: start=0, step=1, limit=4
    $region2: #{tpu_custom_call.1} parent=1 // loop_pre_header
      _
    $region3: #{tpu_custom_call.1} parent=1 // loop_header
      %s17 = sphi 0, %s21
      %p18 = scmp.ge.s32.totalorder %s17, 4
      %s24 = sphi 0, %s36
      %s25 = sphi 0, %s32
      %s26 = sphi 0, %s24
      %s27 = sphi 0, %s25
      %s28 = sphi 0, %s26
      %s29 = sphi 0, %s27
      %s41 = sphi 0, %s43
      %s44 = sphi 0, %s41
      %s45 = sphi 0, %s44
      %s61 = sphi 0, %s45
      %s69 = sphi 0, %s71
      %s72 = sphi 0, %s69
      %s73 = sphi 0, %s72
      %s89 = sphi 0, %s73
      %s95 = sphi 0, %s97
      %s98 = sphi 0, %s95
      %s99 = sphi 0, %s98
      %s115 = sphi 0, %s99
    $region4: #{tpu_custom_call.1} parent=1 // loop_header_branch
      %20 = sbr.rel (%p18) target = $region8
    $region5: #{tpu_custom_call.1} parent=1 // loop_body
      %s22 = ssub.s32 %s17, 1
      %s23 = ssub.s32 %s17, 2
      %s30 = sadd.s32 1, %s25
      %p31 = scmp.ge.s32.totalorder %s30, 1
      %s32 = scalar_select %p31, 0, %s30
      %s33 = sadd.s32 1, %s24
      %s34 = scalar_select %p31, %s33, %s24
      %p35 = scmp.ge.s32.totalorder %s34, 2
      %s36 = scalar_select %p35, 0, %s34
      %s37 = ssub.s32 %s24, %s36
      %s38 = ssub.s32 %s25, %s32
      %s39 = sor.u32 %s37, %s38
      %p40 = scmp.eq.s32.totalorder %s39, 0
      %s42 = sadd.s32 %s41, 1
      %s43 = scalar_select %p40, %s41, %s42
      %p46 = pneg %p40
      %p47 = scmp.eq.s32.totalorder %s17, 1
      %p48 = por %p46, %p47
      %p49 = scmp.ne.s32.totalorder %s41, %s44
      %p50 = scmp.eq.s32.totalorder %s17, 0
      %p51 = por %p49, %p50
      %p52 = scmp.ne.s32.totalorder %s41, %s44
      %p53 = scmp.eq.s32.totalorder %s22, 1
      %p54 = por %p52, %p53
      %p55 = scmp.ne.s32.totalorder %s44, %s45
      %p56 = scmp.eq.s32.totalorder %s22, 0
      %p57 = por %p55, %p56
      %p58 = scmp.ne.s32.totalorder %s44, %s45
      %p59 = scmp.eq.s32.totalorder %s23, 1
      %p60 = por %p58, %p59
      %p62 = scmp.ne.s32.totalorder %s45, %s61
      %p63 = scmp.eq.s32.totalorder %s23, 0
      %p64 = por %p62, %p63
      %s65 = ssub.s32 %s24, %s36
      %s66 = ssub.s32 %s25, %s32
      %s67 = sor.u32 %s65, %s66
      %p68 = scmp.eq.s32.totalorder %s67, 0
      %s70 = sadd.s32 %s69, 1
      %s71 = scalar_select %p68, %s69, %s70
      %p74 = pneg %p68
      %p75 = scmp.eq.s32.totalorder %s17, 1
      %p76 = por %p74, %p75
      %p77 = scmp.ne.s32.totalorder %s69, %s72
      %p78 = scmp.eq.s32.totalorder %s17, 0
      %p79 = por %p77, %p78
      %p80 = scmp.ne.s32.totalorder %s69, %s72
      %p81 = scmp.eq.s32.totalorder %s22, 1
      %p82 = por %p80, %p81
      %p83 = scmp.ne.s32.totalorder %s72, %s73
      %p84 = scmp.eq.s32.totalorder %s22, 0
      %p85 = por %p83, %p84
      %p86 = scmp.ne.s32.totalorder %s72, %s73
      %p87 = scmp.eq.s32.totalorder %s23, 1
      %p88 = por %p86, %p87
      %p90 = scmp.ne.s32.totalorder %s73, %s89
      %p91 = scmp.eq.s32.totalorder %s23, 0
      %p92 = por %p90, %p91
      %s93 = ssub.s32 %s24, %s36
      %p94 = scmp.eq.s32.totalorder %s93, 0
      %s96 = sadd.s32 %s95, 1
      %s97 = scalar_select %p94, %s95, %s96
      %p100 = pneg %p94
      %p101 = scmp.eq.s32.totalorder %s17, 1
      %p102 = por %p100, %p101
      %p103 = scmp.ne.s32.totalorder %s95, %s98
      %p104 = scmp.eq.s32.totalorder %s17, 0
      %p105 = por %p103, %p104
      %p106 = scmp.ne.s32.totalorder %s95, %s98
      %p107 = scmp.eq.s32.totalorder %s22, 1
      %p108 = por %p106, %p107
      %p109 = scmp.ne.s32.totalorder %s98, %s99
      %p110 = scmp.eq.s32.totalorder %s22, 0
      %p111 = por %p109, %p110
      %p112 = scmp.ne.s32.totalorder %s98, %s99
      %p113 = scmp.eq.s32.totalorder %s23, 1
      %p114 = por %p112, %p113
      %p116 = scmp.ne.s32.totalorder %s99, %s115
      %p117 = scmp.eq.s32.totalorder %s23, 0
      %p118 = por %p116, %p117
      %p119 = scmp.le.s32.totalorder 1, %s17
      %p120 = scmp.lt.s32.totalorder %s17, 3
      %p121 = pnand %p119, %p120
      %p122 = pneg %p121
      // Predicated region
      $region9: #{tpu_custom_call.1} parent=5 // pred_check
        _
      $region10: #{tpu_custom_call.1} parent=5 // pred_check_branch
        %124 = sbr.rel (%p121) target = $region12
      $region11: #{tpu_custom_call.1} parent=5 // pred_region
        %s125 = ssub.s32 %s17, 1
      $region12: #{tpu_custom_call.1} parent=5 // pred_fallthru
        _
      %p126 = scmp.lt.s32.totalorder %s17, 2
      // Predicated region
      $region13: #{tpu_custom_call.1} parent=5 // pred_check
        %p127 = pneg %p126
      $region14: #{tpu_custom_call.1} parent=5 // pred_check_branch
        %129 = sbr.rel (%p127) target = $region16
      $region15: #{tpu_custom_call.1} parent=5 // pred_region
        // Predicated region
        $region17: #{tpu_custom_call.1} parent=15 // pred_check
          %p130 = pneg %p51
        $region18: #{tpu_custom_call.1} parent=15 // pred_check_branch
          %132 = sbr.rel (%p130) target = $region20
        $region19: #{tpu_custom_call.1} parent=15 // pred_region
          %s133 = sand.u32 %s41, 1
          %s134 = scalar_lea.sflag [#allocation3], %s133
          %s135 = sand.u32 %s41, 1
          %s136 = smul.addr %s135, 8
          %s137 = scalar_lea.vmem [#allocation2], %s136
          %s139 = ssub.s32 128, 128
          %140 = vsyncadd %s134, %s139
          %s141 = sadd.s32 %s25, %s24
          %s142 = smul.addr %s141, 128
          %s143 = scalar_lea.hbm %s0, %s142
          %s145 = sshll.u32 %s137, 4
          %s146 = int_to_ptr.vmem [resolvable:$true] %s145
          %148 = dma.hbm_to_vmem [thread:$0]  %s143, 128, %s146, %s134
        $region20: #{tpu_custom_call.1} parent=15 // pred_fallthru
          _
        // Predicated region
        $region21: #{tpu_custom_call.1} parent=15 // pred_check
          %p149 = pneg %p79
        $region22: #{tpu_custom_call.1} parent=15 // pred_check_branch
          %151 = sbr.rel (%p149) target = $region24
        $region23: #{tpu_custom_call.1} parent=15 // pred_region
          %s152 = sand.u32 %s69, 1
          %s153 = scalar_lea.sflag [#allocation6], %s152
          %s154 = sand.u32 %s69, 1
          %s155 = smul.addr %s154, 8
          %s156 = scalar_lea.vmem [#allocation5], %s155
          %s158 = ssub.s32 128, 128
          %159 = vsyncadd %s153, %s158
          %s160 = sadd.s32 %s25, %s24
          %s161 = smul.addr %s160, 128
          %s162 = scalar_lea.hbm %s1, %s161
          %s164 = sshll.u32 %s156, 4
          %s165 = int_to_ptr.vmem [resolvable:$true] %s164
          %167 = dma.hbm_to_vmem [thread:$0]  %s162, 128, %s165, %s153
        $region24: #{tpu_custom_call.1} parent=15 // pred_fallthru
          _
      $region16: #{tpu_custom_call.1} parent=5 // pred_fallthru
        _
      %p168 = scmp.le.s32.totalorder 1, %s17
      %p169 = scmp.lt.s32.totalorder %s17, 3
      %p170 = pnand %p168, %p169
      %p171 = pneg %p170
      // Predicated region
      $region25: #{tpu_custom_call.1} parent=5 // pred_check
        _
      $region26: #{tpu_custom_call.1} parent=5 // pred_check_branch
        %173 = sbr.rel (%p170) target = $region28
      $region27: #{tpu_custom_call.1} parent=5 // pred_region
        %s174 = ssub.s32 %s17, 1
        %s175 = sand.u32 %s44, 1
        %s176 = scalar_lea.sflag [#allocation3], %s175
        %s177 = sand.u32 %s44, 1
        %s178 = smul.addr %s177, 8
        %s179 = scalar_lea.vmem [#allocation2], %s178
        // Predicated region
        $region29: #{tpu_custom_call.1} parent=27 // pred_check
          %p180 = pneg %p57
        $region30: #{tpu_custom_call.1} parent=27 // pred_check_branch
          %182 = sbr.rel (%p180) target = $region32
        $region31: #{tpu_custom_call.1} parent=27 // pred_region
          %183 = dma.done %s176, 128
        $region32: #{tpu_custom_call.1} parent=27 // pred_fallthru
          _
        %s184 = sand.u32 %s72, 1
        %s185 = scalar_lea.sflag [#allocation6], %s184
        %s186 = sand.u32 %s72, 1
        %s187 = smul.addr %s186, 8
        %s188 = scalar_lea.vmem [#allocation5], %s187
        // Predicated region
        $region33: #{tpu_custom_call.1} parent=27 // pred_check
          %p189 = pneg %p85
        $region34: #{tpu_custom_call.1} parent=27 // pred_check_branch
          %191 = sbr.rel (%p189) target = $region36
        $region35: #{tpu_custom_call.1} parent=27 // pred_region
          %192 = dma.done %s185, 128
        $region36: #{tpu_custom_call.1} parent=27 // pred_fallthru
          _
        %s193 = sand.u32 %s44, 1
        %s194 = scalar_lea.sflag [#allocation3], %s193
        %s195 = sand.u32 %s44, 1
        %s196 = smul.addr %s195, 8
        %s197 = scalar_lea.vmem [#allocation2], %s196
        %p198 = pneg %p57
        %p199 = pneg %p54
        %s200 = sand.u32 %s72, 1
        %s201 = scalar_lea.sflag [#allocation6], %s200
        %s202 = sand.u32 %s72, 1
        %s203 = smul.addr %s202, 8
        %s204 = scalar_lea.vmem [#allocation5], %s203
        %p205 = pneg %p85
        %p206 = pneg %p82
        %p207 = pneg %p111
        %p208 = pneg %p108
        %s209 = sand.u32 %s98, 1
        %s210 = scalar_lea.sflag [#allocation4], %s209
        %s211 = sand.u32 %s98, 1
        %s212 = scalar_lea.vmem [#allocation7], %s211
        %p213 = scmp.eq.s32.totalorder %s27, 0
        // Predicated region
        $region37: #{tpu_custom_call.1} parent=27 // pred_check
          %p214 = pneg %p213
        $region38: #{tpu_custom_call.1} parent=27 // pred_check_branch
          %216 = sbr.rel (%p214) target = $region40
        $region39: #{tpu_custom_call.1} parent=27 // pred_region
          %217 = vst [vmem:[%s212] sm:$0x1] 0.0
        $region40: #{tpu_custom_call.1} parent=27 // pred_fallthru
          _
        %v218 = vld [vmem:[%s179] sm:$0xff]
        %v219 = vld [vmem:[%s188] sm:$0xff]
        %v220 = vsub.f32 %v218, %v219
        %v221 = vld [vmem:[%s212] sm:$0x1]
        %v222 = vmul.f32 %v220, %v220
        %v223 = vrot.slane %v222, 4
        %v224 = vadd.f32 %v222, %v223
        %v225 = vrot.slane %v224, 2
        %v226 = vadd.f32 %v224, %v225
        %v227 = vrot.slane %v226, 1
        %v228 = vadd.f32 %v226, %v227
        %v229 = vadd.f32 %v221, %v228
        %230 = vst [vmem:[%s212] sm:$0x1] %v229
        %s231 = sand.u32 %s98, 1
        %s232 = scalar_lea.sflag [#allocation4], %s231
        %s233 = sand.u32 %s98, 1
        %s234 = scalar_lea.vmem [#allocation7], %s233
        // Predicated region
        $region41: #{tpu_custom_call.1} parent=27 // pred_check
          %p235 = pneg %p108
        $region42: #{tpu_custom_call.1} parent=27 // pred_check_branch
          %237 = sbr.rel (%p235) target = $region44
        $region43: #{tpu_custom_call.1} parent=27 // pred_region
          %s239 = ssub.s32 16, 16
          %240 = vsyncadd %s232, %s239
          %s241 = smul.addr %s26, 16
          %s242 = scalar_lea.hbm %s2, %s241
          %s244 = sshll.u32 %s234, 4
          %s245 = int_to_ptr.vmem [resolvable:$true] %s244
          %247 = dma.vmem_to_hbm [thread:$0]  %s245, 16, %s242, %s232
        $region44: #{tpu_custom_call.1} parent=27 // pred_fallthru
          _
      $region28: #{tpu_custom_call.1} parent=5 // pred_fallthru
        _
      %p248 = scmp.le.s32.totalorder 2, %s17
      // Predicated region
      $region45: #{tpu_custom_call.1} parent=5 // pred_check
        %p249 = pneg %p248
      $region46: #{tpu_custom_call.1} parent=5 // pred_check_branch
        %251 = sbr.rel (%p249) target = $region48
      $region47: #{tpu_custom_call.1} parent=5 // pred_region
        %s252 = ssub.s32 %s17, 2
        // Predicated region
        $region49: #{tpu_custom_call.1} parent=47 // pred_check
          %p253 = pneg %p114
        $region50: #{tpu_custom_call.1} parent=47 // pred_check_branch
          %255 = sbr.rel (%p253) target = $region52
        $region51: #{tpu_custom_call.1} parent=47 // pred_region
          %s256 = sand.u32 %s99, 1
          %s257 = scalar_lea.sflag [#allocation4], %s256
          %s258 = sand.u32 %s99, 1
          %s259 = scalar_lea.vmem [#allocation7], %s258
          %260 = dma.done %s257, 16
        $region52: #{tpu_custom_call.1} parent=47 // pred_fallthru
          _
      $region48: #{tpu_custom_call.1} parent=5 // pred_fallthru
        _
    $region6: #{tpu_custom_call.1} parent=1 // loop_footer
      %s21 = sadd.s32 1, %s17
    $region7: #{tpu_custom_call.1} parent=1 // loop_footer_branch
      %16 = sbr.rel target = $region3
    $region8: #{tpu_custom_call.1} parent=1 // loop_exit
      _
    %261 = vsyncpa [#allocation3], 1
    %s262 = scalar_lea.sflag [#allocation3], 1
    %263 = vsyncpa %s262, 1
    %264 = vsyncpa [#allocation6], 1
    %s265 = scalar_lea.sflag [#allocation6], 1
    %266 = vsyncpa %s265, 1
    %267 = vsyncpa [#allocation4], 1
    %s268 = scalar_lea.sflag [#allocation4], 1
    %269 = vsyncpa %s268, 1

</llo_original>
